<compile_context>
chip_gen: v6e
topology: v6e:2x2x1
jax: 0.10.0
libtpu: 0.0.40
codegen_flags: <defaults>
</compile_context>

<pallas_src>
import jax
import jax.numpy as jnp
from jax.experimental import pallas as pl
from jax.experimental.pallas import tpu as pltpu

# ----------------------------- configuration ---------------------------------
SEQ_LEN   = 32     # context_window
PRED_LEN  = 8      # target_window
D_MODEL   = 32
PATCH_LEN = 8
STRIDE    = 8
ENC_IN    = 4
BATCH     = 2
EPS       = 1e-5

# The block-diagonal patching below is only valid for non-overlapping patches.
assert STRIDE == PATCH_LEN, "fused patching assumes stride == patch_len"

N_FULL    = (SEQ_LEN - PATCH_LEN) // STRIDE + 1           # 4 patches of real data
PATCH_NUM = N_FULL + 1                                    # +1: padding_patch='end'
HEAD_NF   = D_MODEL * PATCH_NUM                           # 160


def _vmem():
    return pl.BlockSpec(memory_space=pltpu.MemorySpace.VMEM)


# --------------------------- single fused kernel ------------------------------
def pits_kernel(x_ref, aff_ref, w1t_ref, w2ht_ref, bias_ref, o_ref):
    # Packed per-channel affine: row0=aw, row1=ab, row2=1/(aw+eps^2)
    aw  = aff_ref[0:1, :]                                  # (1, C)
    ab  = aff_ref[1:2, :]                                  # (1, C)
    iaw = aff_ref[2:3, :]                                  # (1, C)
    # Packed biases as column vectors (broadcast over channel lanes).
    b1  = bias_ref[pl.ds(0, HEAD_NF), :]                   # (HEAD_NF, 1)
    b2h = bias_ref[pl.ds(HEAD_NF, PRED_LEN), :]            # (PRED_LEN, 1)
    w1t  = w1t_ref[...]                                    # (HEAD_NF, SEQ_LEN)
    w2ht = w2ht_ref[...]                                    # (PRED_LEN, HEAD_NF)

    # Channels stay on lanes throughout; static unroll over the tiny batch.
    for b in range(BATCH):
        xb = x_ref[pl.ds(b * SEQ_LEN, SEQ_LEN), :]         # (L, C)

        # RevIN 'norm': per-(batch, channel) stats over time (sublane reduce).
        mean = jnp.mean(xb, axis=0, keepdims=True)         # (1, C)
        var  = jnp.mean((xb - mean) ** 2, axis=0, keepdims=True)
        inv_std = jax.lax.rsqrt(var + EPS)
        xn = (xb - mean) * inv_std * aw + ab               # (L, C)

        # Patch + Linear(P->D) (block-diag, pad-patch folded into row L-1),
        # ReLU, then fused Linear(D->D) @ head Linear(D*N -> T).
        h = jnp.dot(w1t, xn, preferred_element_type=jnp.float32) + b1   # (HEAD_NF, C)
        h = jnp.maximum(h, 0.0)
        y = jnp.dot(w2ht, h, preferred_element_type=jnp.float32) + b2h  # (PRED_LEN, C)

        # RevIN 'denorm'  (std = sqrt(var+eps) = (var+eps)*rsqrt(var+eps))
        std = (var + EPS) * inv_std
        y = (y - ab) * iaw
        o_ref[pl.ds(b * PRED_LEN, PRED_LEN), :] = y * std + mean        # (T, C)


def pits_fused_call(x2, p):
    return pl.pallas_call(
        pits_kernel,
        out_shape=jax.ShapeDtypeStruct((BATCH * PRED_LEN, ENC_IN), jnp.float32),
        in_specs=[_vmem()] * 5,
        out_specs=_vmem(),
    )(x2, p["affine"], p["w1t"], p["w2ht"], p["bias"])


# ------------------------ host-side weight preparation ------------------------
def prepare_params(params):
    """One-time re-layout/fold of the PyTorch-layout weights into the fused layout."""
    w1, b1 = params["w1"], params["b1"]            # (P, D), (D,)
    w2, b2 = params["w2"], params["b2"]            # (D, D), (D,)
    wh, bh = params["wh"], params["bh"]            # (HEAD_NF, T), (T,)

    eye4 = jnp.eye(N_FULL, dtype=jnp.float32)
    # W1_head[n*P + p, n*D + d] = w1[p, d]  (zero off the block diagonal)
    w1_head = jnp.einsum("mn,pd->mpnd", eye4, w1).reshape(
        N_FULL * PATCH_LEN, N_FULL * D_MODEL)
    w1_head = jnp.concatenate(
        [w1_head, jnp.zeros((N_FULL * PATCH_LEN, D_MODEL), jnp.float32)], axis=1)
    # All-padding last patch = PATCH_LEN copies of x[L-1]; fold its rank-1
    # contribution (x_last * sum_p w1[p,:]) into row SEQ_LEN-1.
    w1_head = w1_head.at[SEQ_LEN - 1, N_FULL * D_MODEL:].add(jnp.sum(w1, axis=0))

    eye5 = jnp.eye(PATCH_NUM, dtype=jnp.float32)
    # W2_big[n*D + d, n*D + e] = w2[d, e]
    w2_big = jnp.einsum("mn,de->mdne", eye5, w2).reshape(HEAD_NF, HEAD_NF)
    # PyTorch flatten index is d*N + n; our columns are n*D + d -> permute rows.
    wh_perm = wh.reshape(D_MODEL, PATCH_NUM, PRED_LEN).transpose(1, 0, 2)
    wh_perm = wh_perm.reshape(HEAD_NF, PRED_LEN)

    # Fold second per-patch Linear and head Linear (no nonlinearity between them).
    w2h = w2_big @ wh_perm                                   # (HEAD_NF, PRED_LEN)
    b2h = jnp.tile(b2, PATCH_NUM) @ wh_perm + bh             # (PRED_LEN,)
    b1_big = jnp.tile(b1, PATCH_NUM)                         # (HEAD_NF,)

    aw, ab = params["affine_w"], params["affine_b"]
    affine = jnp.stack([aw, ab, 1.0 / (aw + EPS * EPS)], axis=0)   # (3, C)

    return {
        "affine": affine.astype(jnp.float32),
        "w1t":    w1_head.T.astype(jnp.float32),             # (HEAD_NF, SEQ_LEN)
        "w2ht":   w2h.T.astype(jnp.float32),                  # (PRED_LEN, HEAD_NF)
        "bias":   jnp.concatenate([b1_big, b2h]).reshape(HEAD_NF + PRED_LEN, 1)
                     .astype(jnp.float32),
    }


@jax.jit
def pits_forward(x, prepped):
    B, L, C = x.shape
    # Only free (bitcast) reshapes around the kernel - channels stay on lanes,
    # so Model.forward's two permutes are absorbed into the kernel math.
    x2 = x.reshape(B * L, C)
    y2 = pits_fused_call(x2, prepped)                        # (B*T, C)
    return y2.reshape(B, PRED_LEN, C)                        # (B, T, C)


# ----------------------------- pure-JAX reference -----------------------------
def pits_reference(x, params):
    B, L, C = x.shape
    mean = jnp.mean(x, axis=1, keepdims=True)
    std = jnp.sqrt(jnp.mean((x - mean) ** 2, axis=1, keepdims=True) + EPS)
    xn = (x - mean) / std * params["affine_w"].reshape(1, 1, C) \
         + params["affine_b"].reshape(1, 1, C)
    z = jnp.transpose(xn, (0, 2, 1))
    z = jnp.concatenate([z, jnp.repeat(z[:, :, -1:], STRIDE, axis=-1)], axis=-1)
    idx = jnp.arange(PATCH_NUM)[:, None] * STRIDE + jnp.arange(PATCH_LEN)[None, :]
    patches = z[:, :, idx]
    h = jnp.maximum(patches @ params["w1"] + params["b1"], 0.0) @ params["w2"] + params["b2"]
    h = jnp.transpose(h, (0, 1, 3, 2)).reshape(B, C, HEAD_NF)
    y = h @ params["wh"] + params["bh"]
    y = jnp.transpose(y, (0, 2, 1))
    y = (y - params["affine_b"].reshape(1, 1, C)) \
        / (params["affine_w"].reshape(1, 1, C) + EPS * EPS)
    return y * std + mean


# ----------------------------------- main -------------------------------------
if __name__ == "__main__":
    key = jax.random.PRNGKey(0)
    k_x, k_aw, k_ab, k_w1, k_b1, k_w2, k_b2, k_wh, k_bh = jax.random.split(key, 9)

    x = jax.random.normal(k_x, (BATCH, SEQ_LEN, ENC_IN), dtype=jnp.float32)

    params = {
        # RevIN affine params (learnable; perturbed from PyTorch init to exercise the path)
        "affine_w": 1.0 + 0.1 * jax.random.normal(k_aw, (ENC_IN,), jnp.float32),
        "affine_b": 0.05 * jax.random.normal(k_ab, (ENC_IN,), jnp.float32),
        # shared embedding MLP: Linear(P->D) -> ReLU -> Linear(D->D)
        "w1": 0.2 * jax.random.normal(k_w1, (PATCH_LEN, D_MODEL), jnp.float32),
        "b1": 0.1 * jax.random.normal(k_b1, (D_MODEL,), jnp.float32),
        "w2": 0.2 * jax.random.normal(k_w2, (D_MODEL, D_MODEL), jnp.float32),
        "b2": 0.1 * jax.random.normal(k_b2, (D_MODEL,), jnp.float32),
        # flatten head: Linear(D*N -> pred_len)
        "wh": 0.1 * jax.random.normal(k_wh, (HEAD_NF, PRED_LEN), jnp.float32),
        "bh": 0.1 * jax.random.normal(k_bh, (PRED_LEN,), jnp.float32),
    }

    prepped = prepare_params(params)

    out = jax.block_until_ready(pits_forward(x, prepped))
    ref = jax.block_until_ready(pits_reference(x, params))

    assert out.shape == (BATCH, PRED_LEN, ENC_IN), out.shape
    max_err = float(jnp.max(jnp.abs(out - ref)))
    assert jnp.allclose(out, ref, atol=1e-4, rtol=1e-4), max_err
    print("KERNEL_OK")
</pallas_src>

<mosaic_0001>
module attributes {stable_mosaic.version = 11 : i64} {
  func.func @pits_kernel(%arg0: memref<64x4xf32, #tpu.memory_space<vmem>>, %arg1: memref<3x4xf32, #tpu.memory_space<vmem>>, %arg2: memref<160x32xf32, #tpu.memory_space<vmem>>, %arg3: memref<8x160xf32, #tpu.memory_space<vmem>>, %arg4: memref<168x1xf32, #tpu.memory_space<vmem>>, %arg5: memref<16x4xf32, #tpu.memory_space<vmem>>) attributes {dimension_semantics = [], scalar_prefetch = 0 : i64, scratch_operands = 0 : i64, tpu.core_type = #tpu.core_type<tc>} {
    %c0 = arith.constant 0 : index
    %c0_0 = arith.constant 0 : index
    %0 = vector.load %arg1[%c0, %c0_0] : memref<3x4xf32, #tpu.memory_space<vmem>>, vector<1x4xf32>
    %c1 = arith.constant 1 : index
    %c0_1 = arith.constant 0 : index
    %1 = vector.load %arg1[%c1, %c0_1] : memref<3x4xf32, #tpu.memory_space<vmem>>, vector<1x4xf32>
    %c2 = arith.constant 2 : index
    %c0_2 = arith.constant 0 : index
    %2 = vector.load %arg1[%c2, %c0_2] : memref<3x4xf32, #tpu.memory_space<vmem>>, vector<1x4xf32>
    %c0_3 = arith.constant 0 : index
    %c0_4 = arith.constant 0 : index
    %3 = vector.load %arg4[%c0_3, %c0_4] : memref<168x1xf32, #tpu.memory_space<vmem>>, vector<160x1xf32>
    %c160 = arith.constant 160 : index
    %c0_5 = arith.constant 0 : index
    %4 = vector.load %arg4[%c160, %c0_5] : memref<168x1xf32, #tpu.memory_space<vmem>>, vector<8x1xf32>
    %c0_6 = arith.constant 0 : index
    %c0_7 = arith.constant 0 : index
    %5 = vector.load %arg2[%c0_6, %c0_7] : memref<160x32xf32, #tpu.memory_space<vmem>>, vector<160x32xf32>
    %c0_8 = arith.constant 0 : index
    %c0_9 = arith.constant 0 : index
    %6 = vector.load %arg3[%c0_8, %c0_9] : memref<8x160xf32, #tpu.memory_space<vmem>>, vector<8x160xf32>
    %c0_10 = arith.constant 0 : index
    %c0_11 = arith.constant 0 : index
    %7 = vector.load %arg0[%c0_10, %c0_11] : memref<64x4xf32, #tpu.memory_space<vmem>>, vector<32x4xf32>
    %cst = arith.constant dense<0.000000e+00> : vector<4xf32>
    %8 = vector.multi_reduction <add>, %7, %cst [0] : vector<32x4xf32> to vector<4xf32>
    %9 = vector.shape_cast %8 : vector<4xf32> to vector<1x4xf32>
    %cst_12 = arith.constant 3.200000e+01 : f32
    %10 = vector.broadcast %cst_12 : f32 to vector<1x4xf32>
    %11 = arith.divf %9, %10 : vector<1x4xf32>
    %12 = vector.broadcast %11 : vector<1x4xf32> to vector<32x4xf32>
    %13 = arith.subf %7, %12 : vector<32x4xf32>
    %14 = arith.mulf %13, %13 : vector<32x4xf32>
    %cst_13 = arith.constant dense<0.000000e+00> : vector<4xf32>
    %15 = vector.multi_reduction <add>, %14, %cst_13 [0] : vector<32x4xf32> to vector<4xf32>
    %16 = vector.shape_cast %15 : vector<4xf32> to vector<1x4xf32>
    %cst_14 = arith.constant 3.200000e+01 : f32
    %17 = vector.broadcast %cst_14 : f32 to vector<1x4xf32>
    %18 = arith.divf %16, %17 : vector<1x4xf32>
    %cst_15 = arith.constant 9.99999974E-6 : f32
    %19 = vector.broadcast %cst_15 : f32 to vector<1x4xf32>
    %20 = arith.addf %18, %19 : vector<1x4xf32>
    %21 = math.rsqrt %20 : vector<1x4xf32>
    %22 = vector.broadcast %11 : vector<1x4xf32> to vector<32x4xf32>
    %23 = arith.subf %7, %22 : vector<32x4xf32>
    %24 = vector.broadcast %21 : vector<1x4xf32> to vector<32x4xf32>
    %25 = arith.mulf %23, %24 : vector<32x4xf32>
    %26 = vector.broadcast %0 : vector<1x4xf32> to vector<32x4xf32>
    %27 = arith.mulf %25, %26 : vector<32x4xf32>
    %28 = vector.broadcast %1 : vector<1x4xf32> to vector<32x4xf32>
    %29 = arith.addf %27, %28 : vector<32x4xf32>
    %cst_16 = arith.constant dense<0.000000e+00> : vector<160x4xf32>
    %30 = tpu.matmul %5, %29, %cst_16 {dimension_numbers = #tpu.dot_dimension_numbers<[1], [0], [0], [1], [0, 0, 1, 1], [], []>} : vector<160x32xf32>, vector<32x4xf32>, vector<160x4xf32> -> vector<160x4xf32>
    %31 = vector.broadcast %3 : vector<160x1xf32> to vector<160x4xf32>
    %32 = arith.addf %30, %31 : vector<160x4xf32>
    %cst_17 = arith.constant 0.000000e+00 : f32
    %33 = vector.broadcast %cst_17 : f32 to vector<160x4xf32>
    %34 = arith.maximumf %32, %33 : vector<160x4xf32>
    %cst_18 = arith.constant dense<0.000000e+00> : vector<8x4xf32>
    %35 = tpu.matmul %6, %34, %cst_18 {dimension_numbers = #tpu.dot_dimension_numbers<[1], [0], [0], [1], [0, 0, 1, 1], [], []>} : vector<8x160xf32>, vector<160x4xf32>, vector<8x4xf32> -> vector<8x4xf32>
    %36 = vector.broadcast %4 : vector<8x1xf32> to vector<8x4xf32>
    %37 = arith.addf %35, %36 : vector<8x4xf32>
    %cst_19 = arith.constant 9.99999974E-6 : f32
    %38 = vector.broadcast %cst_19 : f32 to vector<1x4xf32>
    %39 = arith.addf %18, %38 : vector<1x4xf32>
    %40 = arith.mulf %39, %21 : vector<1x4xf32>
    %41 = vector.broadcast %1 : vector<1x4xf32> to vector<8x4xf32>
    %42 = arith.subf %37, %41 : vector<8x4xf32>
    %43 = vector.broadcast %2 : vector<1x4xf32> to vector<8x4xf32>
    %44 = arith.mulf %42, %43 : vector<8x4xf32>
    %45 = vector.broadcast %40 : vector<1x4xf32> to vector<8x4xf32>
    %46 = arith.mulf %44, %45 : vector<8x4xf32>
    %47 = vector.broadcast %11 : vector<1x4xf32> to vector<8x4xf32>
    %48 = arith.addf %46, %47 : vector<8x4xf32>
    %c0_20 = arith.constant 0 : index
    %c0_21 = arith.constant 0 : index
    %49 = vector.load %arg5[%c0_20, %c0_21] : memref<16x4xf32, #tpu.memory_space<vmem>>, vector<8x4xf32>
    tpu.vector_store %arg5[%c0_20, %c0_21], %48 {strides = array<i32>} : memref<16x4xf32, #tpu.memory_space<vmem>>, vector<8x4xf32>,
    %c32 = arith.constant 32 : index
    %c0_22 = arith.constant 0 : index
    %50 = vector.load %arg0[%c32, %c0_22] : memref<64x4xf32, #tpu.memory_space<vmem>>, vector<32x4xf32>
    %cst_23 = arith.constant dense<0.000000e+00> : vector<4xf32>
    %51 = vector.multi_reduction <add>, %50, %cst_23 [0] : vector<32x4xf32> to vector<4xf32>
    %52 = vector.shape_cast %51 : vector<4xf32> to vector<1x4xf32>
    %cst_24 = arith.constant 3.200000e+01 : f32
    %53 = vector.broadcast %cst_24 : f32 to vector<1x4xf32>
    %54 = arith.divf %52, %53 : vector<1x4xf32>
    %55 = vector.broadcast %54 : vector<1x4xf32> to vector<32x4xf32>
    %56 = arith.subf %50, %55 : vector<32x4xf32>
    %57 = arith.mulf %56, %56 : vector<32x4xf32>
    %cst_25 = arith.constant dense<0.000000e+00> : vector<4xf32>
    %58 = vector.multi_reduction <add>, %57, %cst_25 [0] : vector<32x4xf32> to vector<4xf32>
    %59 = vector.shape_cast %58 : vector<4xf32> to vector<1x4xf32>
    %cst_26 = arith.constant 3.200000e+01 : f32
    %60 = vector.broadcast %cst_26 : f32 to vector<1x4xf32>
    %61 = arith.divf %59, %60 : vector<1x4xf32>
    %cst_27 = arith.constant 9.99999974E-6 : f32
    %62 = vector.broadcast %cst_27 : f32 to vector<1x4xf32>
    %63 = arith.addf %61, %62 : vector<1x4xf32>
    %64 = math.rsqrt %63 : vector<1x4xf32>
    %65 = vector.broadcast %54 : vector<1x4xf32> to vector<32x4xf32>
    %66 = arith.subf %50, %65 : vector<32x4xf32>
    %67 = vector.broadcast %64 : vector<1x4xf32> to vector<32x4xf32>
    %68 = arith.mulf %66, %67 : vector<32x4xf32>
    %69 = vector.broadcast %0 : vector<1x4xf32> to vector<32x4xf32>
    %70 = arith.mulf %68, %69 : vector<32x4xf32>
    %71 = vector.broadcast %1 : vector<1x4xf32> to vector<32x4xf32>
    %72 = arith.addf %70, %71 : vector<32x4xf32>
    %cst_28 = arith.constant dense<0.000000e+00> : vector<160x4xf32>
    %73 = tpu.matmul %5, %72, %cst_28 {dimension_numbers = #tpu.dot_dimension_numbers<[1], [0], [0], [1], [0, 0, 1, 1], [], []>} : vector<160x32xf32>, vector<32x4xf32>, vector<160x4xf32> -> vector<160x4xf32>
    %74 = vector.broadcast %3 : vector<160x1xf32> to vector<160x4xf32>
    %75 = arith.addf %73, %74 : vector<160x4xf32>
    %cst_29 = arith.constant 0.000000e+00 : f32
    %76 = vector.broadcast %cst_29 : f32 to vector<160x4xf32>
    %77 = arith.maximumf %75, %76 : vector<160x4xf32>
    %cst_30 = arith.constant dense<0.000000e+00> : vector<8x4xf32>
    %78 = tpu.matmul %6, %77, %cst_30 {dimension_numbers = #tpu.dot_dimension_numbers<[1], [0], [0], [1], [0, 0, 1, 1], [], []>} : vector<8x160xf32>, vector<160x4xf32>, vector<8x4xf32> -> vector<8x4xf32>
    %79 = vector.broadcast %4 : vector<8x1xf32> to vector<8x4xf32>
    %80 = arith.addf %78, %79 : vector<8x4xf32>
    %cst_31 = arith.constant 9.99999974E-6 : f32
    %81 = vector.broadcast %cst_31 : f32 to vector<1x4xf32>
    %82 = arith.addf %61, %81 : vector<1x4xf32>
    %83 = arith.mulf %82, %64 : vector<1x4xf32>
    %84 = vector.broadcast %1 : vector<1x4xf32> to vector<8x4xf32>
    %85 = arith.subf %80, %84 : vector<8x4xf32>
    %86 = vector.broadcast %2 : vector<1x4xf32> to vector<8x4xf32>
    %87 = arith.mulf %85, %86 : vector<8x4xf32>
    %88 = vector.broadcast %83 : vector<1x4xf32> to vector<8x4xf32>
    %89 = arith.mulf %87, %88 : vector<8x4xf32>
    %90 = vector.broadcast %54 : vector<1x4xf32> to vector<8x4xf32>
    %91 = arith.addf %89, %90 : vector<8x4xf32>
    %c8 = arith.constant 8 : index
    %c0_32 = arith.constant 0 : index
    %92 = vector.load %arg5[%c8, %c0_32] : memref<16x4xf32, #tpu.memory_space<vmem>>, vector<8x4xf32>
    tpu.vector_store %arg5[%c8, %c0_32], %91 {strides = array<i32>} : memref<16x4xf32, #tpu.memory_space<vmem>>, vector<8x4xf32>,
    return
  }
}

</mosaic_0001>

<llo_original>
// kernel: pits_forward.1
$region0: #{pits_forward.1}
  #allocation0 [shape = 'u32[]', space=smem, size = 0x4, offset = 0x4, fixed_abs, tag = 'smem constant byte address 0x4 - core index']
  #allocation1 [shape = 'u32[144,128]{1,0:T(1,128)}', space=vmem, size = 0x12000, scoped, tag = 'internal scratch']
  %s0 = inlined_call_operand.vmem [shape: f32[64,4], index: 0, kind: input, shape index: {}]
  %s1 = inlined_call_operand.vmem [shape: f32[3,4], index: 1, kind: input, shape index: {}]
  %s2 = inlined_call_operand.vmem [shape: f32[160,32], index: 2, kind: input, shape index: {}]
  %s3 = inlined_call_operand.vmem [shape: f32[8,160], index: 3, kind: input, shape index: {}]
  %s4 = inlined_call_operand.vmem [shape: f32[168,1], index: 4, kind: input, shape index: {}]
  %s5 = inlined_call_operand.vmem [shape: f32[16,4], index: 5, kind: output, shape index: {}]
  %s6 = sld [smem:[#allocation0]]
  $region30: #{pits_forward.1} parent=0
    _
  %s8 = ssub.s32 1, %s6
  %s9 = scalar_select 0, %s8, %s6
  // Predicated region
  $region2: #{pits_forward.1} parent=0 // pred_check
    _
  $region3: #{pits_forward.1} parent=0 // pred_check_branch
    %11 = sbr.rel (0) target = $region5
  $region4: #{pits_forward.1} parent=0 // pred_region
    _
  $region5: #{pits_forward.1} parent=0 // pred_fallthru
    _
  // Predicated region
  $region6: #{pits_forward.1} parent=0 // pred_check
    _
  $region7: #{pits_forward.1} parent=0 // pred_check_branch
    %13 = sbr.rel (0) target = $region9
  $region8: #{pits_forward.1} parent=0 // pred_region
    _
  $region9: #{pits_forward.1} parent=0 // pred_fallthru
    _
  // Predicated region
  $region10: #{pits_forward.1} parent=0 // pred_check
    _
  $region11: #{pits_forward.1} parent=0 // pred_check_branch
    %15 = sbr.rel (0) target = $region13
  $region12: #{pits_forward.1} parent=0 // pred_region
    _
  $region13: #{pits_forward.1} parent=0 // pred_fallthru
    _
  // Predicated region
  $region14: #{pits_forward.1} parent=0 // pred_check
    _
  $region15: #{pits_forward.1} parent=0 // pred_check_branch
    %17 = sbr.rel (0) target = $region17
  $region16: #{pits_forward.1} parent=0 // pred_region
    _
  $region17: #{pits_forward.1} parent=0 // pred_fallthru
    _
  // Predicated region
  $region18: #{pits_forward.1} parent=0 // pred_check
    _
  $region19: #{pits_forward.1} parent=0 // pred_check_branch
    %19 = sbr.rel (0) target = $region21
  $region20: #{pits_forward.1} parent=0 // pred_region
    _
  $region21: #{pits_forward.1} parent=0 // pred_fallthru
    _
  %v20 = vld [vmem:[%s1] sm:$0x1]
  %v21 = vld [vmem:[%s1 + $0x1] sm:$0x1]
  %v22 = vld [vmem:[%s1 + $0x2] sm:$0x1]
  %v23 = vld [vmem:[%s4] sm:$0xff]
  %v24 = vld [vmem:[%s4 + $0x8] sm:$0xff]
  %v25 = vld [vmem:[%s4 + $0x10] sm:$0xff]
  %v26 = vld [vmem:[%s4 + $0x18] sm:$0xff]
  %v27 = vld [vmem:[%s4 + $0x20] sm:$0xff]
  %v28 = vld [vmem:[%s4 + $0x28] sm:$0xff]
  %v29 = vld [vmem:[%s4 + $0x30] sm:$0xff]
  %v30 = vld [vmem:[%s4 + $0x38] sm:$0xff]
  %v31 = vld [vmem:[%s4 + $0x40] sm:$0xff]
  %v32 = vld [vmem:[%s4 + $0x48] sm:$0xff]
  %v33 = vld [vmem:[%s4 + $0x50] sm:$0xff]
  %v34 = vld [vmem:[%s4 + $0x58] sm:$0xff]
  %v35 = vld [vmem:[%s4 + $0x60] sm:$0xff]
  %v36 = vld [vmem:[%s4 + $0x68] sm:$0xff]
  %v37 = vld [vmem:[%s4 + $0x70] sm:$0xff]
  %v38 = vld [vmem:[%s4 + $0x78] sm:$0xff]
  %v39 = vld [vmem:[%s4 + $0x80] sm:$0xff]
  %v40 = vld [vmem:[%s4 + $0x88] sm:$0xff]
  %v41 = vld [vmem:[%s4 + $0x90] sm:$0xff]
  %v42 = vld [vmem:[%s4 + $0x98] sm:$0xff]
  %v43 = vld [vmem:[%s4 + $0xa0] sm:$0xff]
  %v44 = vld [vmem:[%s2] sm:$0xff]
  %v45 = vld [vmem:[%s2 + $0x8] sm:$0xff]
  %v46 = vld [vmem:[%s2 + $0x10] sm:$0xff]
  %v47 = vld [vmem:[%s2 + $0x18] sm:$0xff]
  %v48 = vld [vmem:[%s2 + $0x20] sm:$0xff]
  %v49 = vld [vmem:[%s2 + $0x28] sm:$0xff]
  %v50 = vld [vmem:[%s2 + $0x30] sm:$0xff]
  %v51 = vld [vmem:[%s2 + $0x38] sm:$0xff]
  %v52 = vld [vmem:[%s2 + $0x40] sm:$0xff]
  %v53 = vld [vmem:[%s2 + $0x48] sm:$0xff]
  %v54 = vld [vmem:[%s2 + $0x50] sm:$0xff]
  %v55 = vld [vmem:[%s2 + $0x58] sm:$0xff]
  %v56 = vld [vmem:[%s2 + $0x60] sm:$0xff]
  %v57 = vld [vmem:[%s2 + $0x68] sm:$0xff]
  %v58 = vld [vmem:[%s2 + $0x70] sm:$0xff]
  %v59 = vld [vmem:[%s2 + $0x78] sm:$0xff]
  %v60 = vld [vmem:[%s2 + $0x80] sm:$0xff]
  %v61 = vld [vmem:[%s2 + $0x88] sm:$0xff]
  %v62 = vld [vmem:[%s2 + $0x90] sm:$0xff]
  %v63 = vld [vmem:[%s2 + $0x98] sm:$0xff]
  %v64 = vld [vmem:[%s3] sm:$0xff]
  %v65 = vld [vmem:[%s3 + $0x8] sm:$0xff]
  %v66 = vld [vmem:[%s0] sm:$0xff]
  %v67 = vld [vmem:[%s0 + $0x8] sm:$0xff]
  %v68 = vld [vmem:[%s0 + $0x10] sm:$0xff]
  %v69 = vld [vmem:[%s0 + $0x18] sm:$0xff]
  %vm70 = vcmask 31744
  %v71 = vsel %vm70, %v66, 0.0
  %v72 = vsel %vm70, %v67, 0.0
  %v73 = vadd.f32 %v71, %v72
  %v74 = vsel %vm70, %v68, 0.0
  %v75 = vadd.f32 %v73, %v74
  %v76 = vsel %vm70, %v69, 0.0
  %v77 = vadd.f32 %v75, %v76
  %v78 = vrot.slane %v77, 4
  %v79 = vadd.f32 %v77, %v78
  %v80 = vrot.slane %v79, 2
  %v81 = vadd.f32 %v79, %v80
  %v82 = vrot.slane %v81, 1
  %v83 = vadd.f32 %v81, %v82
  %v84 = vrcp.pop 32.0
  %v85 = vmul.f32 %v83, %v84
  %v86 = vsub.f32 %v66, %v85
  %v87 = vsub.f32 %v67, %v85
  %v88 = vsub.f32 %v68, %v85
  %v89 = vsub.f32 %v69, %v85
  %v90 = vmul.f32 %v86, %v86
  %v91 = vmul.f32 %v87, %v87
  %v92 = vmul.f32 %v88, %v88
  %v93 = vmul.f32 %v89, %v89
  %v94 = vsel %vm70, %v90, 0.0
  %v95 = vsel %vm70, %v91, 0.0
  %v96 = vadd.f32 %v94, %v95
  %v97 = vsel %vm70, %v92, 0.0
  %v98 = vadd.f32 %v96, %v97
  %v99 = vsel %vm70, %v93, 0.0
  %v100 = vadd.f32 %v98, %v99
  %v101 = vrot.slane %v100, 4
  %v102 = vadd.f32 %v100, %v101
  %v103 = vrot.slane %v102, 2
  %v104 = vadd.f32 %v102, %v103
  %v105 = vrot.slane %v104, 1
  %v106 = vadd.f32 %v104, %v105
  %v107 = vmul.f32 %v106, %v84
  %v108 = vadd.f32 %v107, 1e-05
  %v109 = vrsqrt.pop %v108
  %v110 = vmul.f32 %v86, %v109
  %v111 = vmul.f32 %v87, %v109
  %v112 = vmul.f32 %v88, %v109
  %v113 = vmul.f32 %v89, %v109
  %v114 = vlaneseq
  %v115 = vshrl.u32 %v114, 7
  %v116 = vsub.s32 0, %v115
  %v117 = vrot.slane %v20, %v116
  %v118 = vmul.f32 %v110, %v117
  %v119 = vmul.f32 %v111, %v117
  %v120 = vmul.f32 %v112, %v117
  %v121 = vmul.f32 %v113, %v117
  %v122 = vlaneseq
  %v123 = vshrl.u32 %v122, 7
  %v124 = vsub.s32 0, %v123
  %v125 = vrot.slane %v21, %v124
  %v126 = vadd.f32 %v118, %v125
  %v127 = vadd.f32 %v119, %v125
  %v128 = vadd.f32 %v120, %v125
  %v129 = vadd.f32 %v121, %v125
  %131 = vset.pattern.permute.xlu0 0
  %132 = vperm.xlu0 %131, %v23
  %v133 = vpop.permute.xlu0 %132
  %136 = vset.pattern.permute.xlu0 0
  %137 = vperm.xlu0 %136, %v24
  %v138 = vpop.permute.xlu0 %137
  %141 = vset.pattern.permute.xlu0 0
  %142 = vperm.xlu0 %141, %v25
  %v143 = vpop.permute.xlu0 %142
  %146 = vset.pattern.permute.xlu0 0
  %147 = vperm.xlu0 %146, %v26
  %v148 = vpop.permute.xlu0 %147
  %151 = vset.pattern.permute.xlu0 0
  %152 = vperm.xlu0 %151, %v27
  %v153 = vpop.permute.xlu0 %152
  %156 = vset.pattern.permute.xlu0 0
  %157 = vperm.xlu0 %156, %v28
  %v158 = vpop.permute.xlu0 %157
  %161 = vset.pattern.permute.xlu0 0
  %162 = vperm.xlu0 %161, %v29
  %v163 = vpop.permute.xlu0 %162
  %166 = vset.pattern.permute.xlu0 0
  %167 = vperm.xlu0 %166, %v30
  %v168 = vpop.permute.xlu0 %167
  %171 = vset.pattern.permute.xlu0 0
  %172 = vperm.xlu0 %171, %v31
  %v173 = vpop.permute.xlu0 %172
  %176 = vset.pattern.permute.xlu0 0
  %177 = vperm.xlu0 %176, %v32
  %v178 = vpop.permute.xlu0 %177
  %181 = vset.pattern.permute.xlu0 0
  %182 = vperm.xlu0 %181, %v33
  %v183 = vpop.permute.xlu0 %182
  %186 = vset.pattern.permute.xlu0 0
  %187 = vperm.xlu0 %186, %v34
  %v188 = vpop.permute.xlu0 %187
  %191 = vset.pattern.permute.xlu0 0
  %192 = vperm.xlu0 %191, %v35
  %v193 = vpop.permute.xlu0 %192
  %196 = vset.pattern.permute.xlu0 0
  %197 = vperm.xlu0 %196, %v36
  %v198 = vpop.permute.xlu0 %197
  %201 = vset.pattern.permute.xlu0 0
  %202 = vperm.xlu0 %201, %v37
  %v203 = vpop.permute.xlu0 %202
  %206 = vset.pattern.permute.xlu0 0
  %207 = vperm.xlu0 %206, %v38
  %v208 = vpop.permute.xlu0 %207
  %211 = vset.pattern.permute.xlu0 0
  %212 = vperm.xlu0 %211, %v39
  %v213 = vpop.permute.xlu0 %212
  %216 = vset.pattern.permute.xlu0 0
  %217 = vperm.xlu0 %216, %v40
  %v218 = vpop.permute.xlu0 %217
  %221 = vset.pattern.permute.xlu0 0
  %222 = vperm.xlu0 %221, %v41
  %v223 = vpop.permute.xlu0 %222
  %226 = vset.pattern.permute.xlu0 0
  %227 = vperm.xlu0 %226, %v42
  %v228 = vpop.permute.xlu0 %227
  %vm230 = vcmask 261120
  %v232 = vsel %vm230, %v44, 0
  %v235 = vsel %vm230, %v45, 0
  %v238 = vsel %vm230, %v46, 0
  %v241 = vsel %vm230, %v47, 0
  %v244 = vsel %vm230, %v48, 0
  %v247 = vsel %vm230, %v49, 0
  %v250 = vsel %vm230, %v50, 0
  %v253 = vsel %vm230, %v51, 0
  %v256 = vsel %vm230, %v52, 0
  %v259 = vsel %vm230, %v53, 0
  %v262 = vsel %vm230, %v54, 0
  %v265 = vsel %vm230, %v55, 0
  %v268 = vsel %vm230, %v56, 0
  %v271 = vsel %vm230, %v57, 0
  %v274 = vsel %vm230, %v58, 0
  %v277 = vsel %vm230, %v59, 0
  %v280 = vsel %vm230, %v60, 0
  %v283 = vsel %vm230, %v61, 0
  %v286 = vsel %vm230, %v62, 0
  %v289 = vsel %vm230, %v63, 0
  %291 = vmatprep.subr.mxu0 0.0
  %292 = vmatpush1.msra.mxu0 0.0
  %293 = vmatprep.subr.mxu0 0.0
  %294 = vmatpush1.msra.mxu0 0.0
  %295 = vmatprep.subr.mxu0 0.0
  %296 = vmatpush1.msra.mxu0 0.0
  %297 = vmatprep.subr.mxu0 0.0
  %298 = vmatpush1.msra.mxu0 0.0
  %299 = vmatprep.subr.mxu0 0.0
  %300 = vmatpush1.msra.mxu0 0.0
  %301 = vmatprep.subr.mxu0 0.0
  %302 = vmatpush1.msra.mxu0 0.0
  %303 = vmatprep.subr.mxu0 0.0
  %304 = vmatpush1.msra.mxu0 0.0
  %305 = vmatprep.subr.mxu0 0.0
  %306 = vmatpush1.msra.mxu0 0.0
  %307 = vmatprep.subr.mxu0 0.0
  %308 = vmatpush1.msra.mxu0 0.0
  %309 = vmatprep.subr.mxu0 0.0
  %310 = vmatpush1.msra.mxu0 0.0
  %311 = vmatprep.subr.mxu0 0.0
  %312 = vmatpush1.msra.mxu0 0.0
  %313 = vmatprep.subr.mxu0 0.0
  %314 = vmatpush1.msra.mxu0 0.0
  %315 = vmatprep.subr.mxu0 0.0
  %316 = vmatpush1.msra.mxu0 %v129
  %317 = vmatprep.subr.mxu0 0.0
  %318 = vmatpush1.msra.mxu0 %v128
  %319 = vmatprep.subr.mxu0 0.0
  %320 = vmatpush1.msra.mxu0 %v127
  %321 = vmatprep.subr.mxu0 0.0
  %322 = vmatpush1.msra.mxu0 %v126
  %323 = vmatprep.subr.mxu0 0.0
  %324 = vmatpush2.msra.mxu0 0.0
  %325 = vmatprep.subr.mxu0 0.0
  %326 = vmatpush2.msra.mxu0 0.0
  %327 = vmatprep.subr.mxu0 0.0
  %328 = vmatpush2.msra.mxu0 0.0
  %329 = vmatprep.subr.mxu0 0.0
  %330 = vmatpush2.msra.mxu0 0.0
  %331 = vmatprep.subr.mxu0 0.0
  %332 = vmatpush2.msra.mxu0 0.0
  %333 = vmatprep.subr.mxu0 0.0
  %334 = vmatpush2.msra.mxu0 0.0
  %335 = vmatprep.subr.mxu0 0.0
  %336 = vmatpush2.msra.mxu0 0.0
  %337 = vmatprep.subr.mxu0 0.0
  %338 = vmatpush2.msra.mxu0 0.0
  %339 = vmatprep.subr.mxu0 0.0
  %340 = vmatpush2.msra.mxu0 0.0
  %341 = vmatprep.subr.mxu0 0.0
  %342 = vmatpush2.msra.mxu0 0.0
  %343 = vmatprep.subr.mxu0 0.0
  %344 = vmatpush2.msra.mxu0 0.0
  %345 = vmatprep.subr.mxu0 0.0
  %346 = vmatpush2.msra.mxu0 0.0
  %347 = vmatprep.subr.mxu0 0.0
  %348 = vmatpush2.msra.mxu0 0.0
  %349 = vmatprep.subr.mxu0 0.0
  %350 = vmatpush2.msra.mxu0 0.0
  %351 = vmatprep.subr.mxu0 0.0
  %352 = vmatpush2.msra.mxu0 0.0
  %353 = vmatprep.subr.mxu0 0.0
  %354 = vmatpush2.msra.mxu0 0.0
  %355 = vmatprep.mubr.f32.mxu0 0.0
  %356 = vmatmul.mubr.f32.gmra.mxu0 %v232
  %v357 = vpop.f32.mrf.mxu0
  %v358 = vadd.f32 %v133, %v357
  %v359 = vpop.f32.mrf.mxu0
  %360 = vmatprep.mubr.f32.mxu0 0.0
  %361 = vmatmul.mubr.f32.gmra.mxu0 %v235
  %v362 = vpop.f32.mrf.mxu0
  %v363 = vadd.f32 %v138, %v362
  %v364 = vpop.f32.mrf.mxu0
  %365 = vmatprep.mubr.f32.mxu0 0.0
  %366 = vmatmul.mubr.f32.gmra.mxu0 %v238
  %v367 = vpop.f32.mrf.mxu0
  %v368 = vadd.f32 %v143, %v367
  %v369 = vpop.f32.mrf.mxu0
  %370 = vmatprep.mubr.f32.mxu0 0.0
  %371 = vmatmul.mubr.f32.gmra.mxu0 %v241
  %v372 = vpop.f32.mrf.mxu0
  %v373 = vadd.f32 %v148, %v372
  %v374 = vpop.f32.mrf.mxu0
  %375 = vmatprep.mubr.f32.mxu0 0.0
  %376 = vmatmul.mubr.f32.gmra.mxu0 %v244
  %v377 = vpop.f32.mrf.mxu0
  %v378 = vadd.f32 %v153, %v377
  %v379 = vpop.f32.mrf.mxu0
  %380 = vmatprep.mubr.f32.mxu0 0.0
  %381 = vmatmul.mubr.f32.gmra.mxu0 %v247
  %v382 = vpop.f32.mrf.mxu0
  %v383 = vadd.f32 %v158, %v382
  %v384 = vpop.f32.mrf.mxu0
  %385 = vmatprep.mubr.f32.mxu0 0.0
  %386 = vmatmul.mubr.f32.gmra.mxu0 %v250
  %v387 = vpop.f32.mrf.mxu0
  %v388 = vadd.f32 %v163, %v387
  %v389 = vpop.f32.mrf.mxu0
  %390 = vmatprep.mubr.f32.mxu0 0.0
  %391 = vmatmul.mubr.f32.gmra.mxu0 %v253
  %v392 = vpop.f32.mrf.mxu0
  %v393 = vadd.f32 %v168, %v392
  %v394 = vpop.f32.mrf.mxu0
  %395 = vmatprep.mubr.f32.mxu0 0.0
  %396 = vmatmul.mubr.f32.gmra.mxu0 %v256
  %v397 = vpop.f32.mrf.mxu0
  %v398 = vadd.f32 %v173, %v397
  %v399 = vpop.f32.mrf.mxu0
  %400 = vmatprep.mubr.f32.mxu0 0.0
  %401 = vmatmul.mubr.f32.gmra.mxu0 %v259
  %v402 = vpop.f32.mrf.mxu0
  %v403 = vadd.f32 %v178, %v402
  %v404 = vpop.f32.mrf.mxu0
  %405 = vmatprep.mubr.f32.mxu0 0.0
  %406 = vmatmul.mubr.f32.gmra.mxu0 %v262
  %v407 = vpop.f32.mrf.mxu0
  %v408 = vadd.f32 %v183, %v407
  %v409 = vpop.f32.mrf.mxu0
  %410 = vmatprep.mubr.f32.mxu0 0.0
  %411 = vmatmul.mubr.f32.gmra.mxu0 %v265
  %v412 = vpop.f32.mrf.mxu0
  %v413 = vadd.f32 %v188, %v412
  %v414 = vpop.f32.mrf.mxu0
  %415 = vmatprep.mubr.f32.mxu0 0.0
  %416 = vmatmul.mubr.f32.gmra.mxu0 %v268
  %v417 = vpop.f32.mrf.mxu0
  %v418 = vadd.f32 %v193, %v417
  %v419 = vpop.f32.mrf.mxu0
  %420 = vmatprep.mubr.f32.mxu0 0.0
  %421 = vmatmul.mubr.f32.gmra.mxu0 %v271
  %v422 = vpop.f32.mrf.mxu0
  %v423 = vadd.f32 %v198, %v422
  %v424 = vpop.f32.mrf.mxu0
  %425 = vmatprep.mubr.f32.mxu0 0.0
  %426 = vmatmul.mubr.f32.gmra.mxu0 %v274
  %v427 = vpop.f32.mrf.mxu0
  %v428 = vadd.f32 %v203, %v427
  %v429 = vpop.f32.mrf.mxu0
  %430 = vmatprep.mubr.f32.mxu0 0.0
  %431 = vmatmul.mubr.f32.gmra.mxu0 %v277
  %v432 = vpop.f32.mrf.mxu0
  %v433 = vadd.f32 %v208, %v432
  %v434 = vpop.f32.mrf.mxu0
  %435 = vmatprep.mubr.f32.mxu0 0.0
  %436 = vmatmul.mubr.f32.gmra.mxu0 %v280
  %v437 = vpop.f32.mrf.mxu0
  %v438 = vadd.f32 %v213, %v437
  %v439 = vpop.f32.mrf.mxu0
  %440 = vmatprep.mubr.f32.mxu0 0.0
  %441 = vmatmul.mubr.f32.gmra.mxu0 %v283
  %v442 = vpop.f32.mrf.mxu0
  %v443 = vadd.f32 %v218, %v442
  %v444 = vpop.f32.mrf.mxu0
  %445 = vmatprep.mubr.f32.mxu0 0.0
  %446 = vmatmul.mubr.f32.gmra.mxu0 %v286
  %v447 = vpop.f32.mrf.mxu0
  %v448 = vadd.f32 %v223, %v447
  %v449 = vpop.f32.mrf.mxu0
  %450 = vmatprep.mubr.f32.mxu0 0.0
  %451 = vmatmul.mubr.f32.gmra.mxu0 %v289
  %v452 = vpop.f32.mrf.mxu0
  %v453 = vadd.f32 %v228, %v452
  %v454 = vpop.f32.mrf.mxu0
  %455 = vdwg.mxu0
  %v456 = vmax.f32 %v358, 0.0
  %v457 = vmax.f32 %v363, 0.0
  %v458 = vmax.f32 %v368, 0.0
  %v459 = vmax.f32 %v373, 0.0
  %v460 = vmax.f32 %v378, 0.0
  %v461 = vmax.f32 %v383, 0.0
  %v462 = vmax.f32 %v388, 0.0
  %v463 = vmax.f32 %v393, 0.0
  %v464 = vmax.f32 %v398, 0.0
  %v465 = vmax.f32 %v403, 0.0
  %v466 = vmax.f32 %v408, 0.0
  %v467 = vmax.f32 %v413, 0.0
  %v468 = vmax.f32 %v418, 0.0
  %v469 = vmax.f32 %v423, 0.0
  %v470 = vmax.f32 %v428, 0.0
  %v471 = vmax.f32 %v433, 0.0
  %v472 = vmax.f32 %v438, 0.0
  %v473 = vmax.f32 %v443, 0.0
  %v474 = vmax.f32 %v448, 0.0
  %v475 = vmax.f32 %v453, 0.0
  %477 = vset.pattern.permute.xlu0 0
  %478 = vperm.xlu0 %477, %v43
  %v479 = vpop.permute.xlu0 %478
  %v482 = vsel %vm230, %v65, 0
  %484 = vmatprep.subr.mxu0 0.0
  %485 = vmatpush1.msra.mxu0 %v471
  %486 = vmatprep.subr.mxu0 0.0
  %487 = vmatpush1.msra.mxu0 %v470
  %488 = vmatprep.subr.mxu0 0.0
  %489 = vmatpush1.msra.mxu0 %v469
  %490 = vmatprep.subr.mxu0 0.0
  %491 = vmatpush1.msra.mxu0 %v468
  %492 = vmatprep.subr.mxu0 0.0
  %493 = vmatpush1.msra.mxu0 %v467
  %494 = vmatprep.subr.mxu0 0.0
  %495 = vmatpush1.msra.mxu0 %v466
  %496 = vmatprep.subr.mxu0 0.0
  %497 = vmatpush1.msra.mxu0 %v465
  %498 = vmatprep.subr.mxu0 0.0
  %499 = vmatpush1.msra.mxu0 %v464
  %500 = vmatprep.subr.mxu0 0.0
  %501 = vmatpush1.msra.mxu0 %v463
  %502 = vmatprep.subr.mxu0 0.0
  %503 = vmatpush1.msra.mxu0 %v462
  %504 = vmatprep.subr.mxu0 0.0
  %505 = vmatpush1.msra.mxu0 %v461
  %506 = vmatprep.subr.mxu0 0.0
  %507 = vmatpush1.msra.mxu0 %v460
  %508 = vmatprep.subr.mxu0 0.0
  %509 = vmatpush1.msra.mxu0 %v459
  %510 = vmatprep.subr.mxu0 0.0
  %511 = vmatpush1.msra.mxu0 %v458
  %512 = vmatprep.subr.mxu0 0.0
  %513 = vmatpush1.msra.mxu0 %v457
  %514 = vmatprep.subr.mxu0 0.0
  %515 = vmatpush1.msra.mxu0 %v456
  %516 = vmatprep.subr.mxu0 0.0
  %517 = vmatpush2.msra.mxu0 0.0
  %518 = vmatprep.subr.mxu0 0.0
  %519 = vmatpush2.msra.mxu0 0.0
  %520 = vmatprep.subr.mxu0 0.0
  %521 = vmatpush2.msra.mxu0 0.0
  %522 = vmatprep.subr.mxu0 0.0
  %523 = vmatpush2.msra.mxu0 0.0
  %524 = vmatprep.subr.mxu0 0.0
  %525 = vmatpush2.msra.mxu0 0.0
  %526 = vmatprep.subr.mxu0 0.0
  %527 = vmatpush2.msra.mxu0 0.0
  %528 = vmatprep.subr.mxu0 0.0
  %529 = vmatpush2.msra.mxu0 0.0
  %530 = vmatprep.subr.mxu0 0.0
  %531 = vmatpush2.msra.mxu0 0.0
  %532 = vmatprep.subr.mxu0 0.0
  %533 = vmatpush2.msra.mxu0 0.0
  %534 = vmatprep.subr.mxu0 0.0
  %535 = vmatpush2.msra.mxu0 0.0
  %536 = vmatprep.subr.mxu0 0.0
  %537 = vmatpush2.msra.mxu0 0.0
  %538 = vmatprep.subr.mxu0 0.0
  %539 = vmatpush2.msra.mxu0 0.0
  %540 = vmatprep.subr.mxu0 0.0
  %541 = vmatpush2.msra.mxu0 %v475
  %542 = vmatprep.subr.mxu0 0.0
  %543 = vmatpush2.msra.mxu0 %v474
  %544 = vmatprep.subr.mxu0 0.0
  %545 = vmatpush2.msra.mxu0 %v473
  %546 = vmatprep.subr.mxu0 0.0
  %547 = vmatpush2.msra.mxu0 %v472
  %548 = vmatprep.mubr.f32.mxu0 %v482
  %549 = vmatmul.mubr.f32.gmra.mxu0 %v64
  %v550 = vpop.f32.mrf.mxu0
  %v551 = vadd.f32 %v479, %v550
  %v552 = vpop.f32.mrf.mxu0
  %553 = vdwg.mxu0
  %v554 = vmul.f32 %v108, %v109
  %v555 = vsub.f32 %v551, %v125
  %v556 = vlaneseq
  %v557 = vshrl.u32 %v556, 7
  %v558 = vsub.s32 0, %v557
  %v559 = vrot.slane %v22, %v558
  %v560 = vmul.f32 %v555, %v559
  %v561 = vmul.f32 %v560, %v554
  %v562 = vadd.f32 %v561, %v85
  %563 = vst.msk [vmem:[%s5] sm:$0xff] %vm70, %v562
  %v564 = vld [vmem:[%s0 + $0x20] sm:$0xff]
  %v565 = vld [vmem:[%s0 + $0x28] sm:$0xff]
  %v566 = vld [vmem:[%s0 + $0x30] sm:$0xff]
  %v567 = vld [vmem:[%s0 + $0x38] sm:$0xff]
  %v568 = vsel %vm70, %v564, 0.0
  %v569 = vsel %vm70, %v565, 0.0
  %v570 = vadd.f32 %v568, %v569
  %v571 = vsel %vm70, %v566, 0.0
  %v572 = vadd.f32 %v570, %v571
  %v573 = vsel %vm70, %v567, 0.0
  %v574 = vadd.f32 %v572, %v573
  %v575 = vrot.slane %v574, 4
  %v576 = vadd.f32 %v574, %v575
  %v577 = vrot.slane %v576, 2
  %v578 = vadd.f32 %v576, %v577
  %v579 = vrot.slane %v578, 1
  %v580 = vadd.f32 %v578, %v579
  %v581 = vmul.f32 %v580, %v84
  %v582 = vsub.f32 %v564, %v581
  %v583 = vsub.f32 %v565, %v581
  %v584 = vsub.f32 %v566, %v581
  %v585 = vsub.f32 %v567, %v581
  %v586 = vmul.f32 %v582, %v582
  %v587 = vmul.f32 %v583, %v583
  %v588 = vmul.f32 %v584, %v584
  %v589 = vmul.f32 %v585, %v585
  %v590 = vsel %vm70, %v586, 0.0
  %v591 = vsel %vm70, %v587, 0.0
  %v592 = vadd.f32 %v590, %v591
  %v593 = vsel %vm70, %v588, 0.0
  %v594 = vadd.f32 %v592, %v593
  %v595 = vsel %vm70, %v589, 0.0
  %v596 = vadd.f32 %v594, %v595
  %v597 = vrot.slane %v596, 4
  %v598 = vadd.f32 %v596, %v597
  %v599 = vrot.slane %v598, 2
  %v600 = vadd.f32 %v598, %v599
  %v601 = vrot.slane %v600, 1
  %v602 = vadd.f32 %v600, %v601
  %v603 = vmul.f32 %v602, %v84
  %v604 = vadd.f32 %v603, 1e-05
  %v605 = vrsqrt.pop %v604
  %v606 = vmul.f32 %v582, %v605
  %v607 = vmul.f32 %v583, %v605
  %v608 = vmul.f32 %v584, %v605
  %v609 = vmul.f32 %v585, %v605
  %v610 = vmul.f32 %v606, %v117
  %v611 = vmul.f32 %v607, %v117
  %v612 = vmul.f32 %v608, %v117
  %v613 = vmul.f32 %v609, %v117
  %v614 = vadd.f32 %v610, %v125
  %v615 = vadd.f32 %v611, %v125
  %v616 = vadd.f32 %v612, %v125
  %v617 = vadd.f32 %v613, %v125
  %618 = vmatprep.subr.mxu0 0.0
  %619 = vmatpush1.msra.mxu0 0.0
  %620 = vmatprep.subr.mxu0 0.0
  %621 = vmatpush1.msra.mxu0 0.0
  %622 = vmatprep.subr.mxu0 0.0
  %623 = vmatpush1.msra.mxu0 0.0
  %624 = vmatprep.subr.mxu0 0.0
  %625 = vmatpush1.msra.mxu0 0.0
  %626 = vmatprep.subr.mxu0 0.0
  %627 = vmatpush1.msra.mxu0 0.0
  %628 = vmatprep.subr.mxu0 0.0
  %629 = vmatpush1.msra.mxu0 0.0
  %630 = vmatprep.subr.mxu0 0.0
  %631 = vmatpush1.msra.mxu0 0.0
  %632 = vmatprep.subr.mxu0 0.0
  %633 = vmatpush1.msra.mxu0 0.0
  %634 = vmatprep.subr.mxu0 0.0
  %635 = vmatpush1.msra.mxu0 0.0
  %636 = vmatprep.subr.mxu0 0.0
  %637 = vmatpush1.msra.mxu0 0.0
  %638 = vmatprep.subr.mxu0 0.0
  %639 = vmatpush1.msra.mxu0 0.0
  %640 = vmatprep.subr.mxu0 0.0
  %641 = vmatpush1.msra.mxu0 0.0
  %642 = vmatprep.subr.mxu0 0.0
  %643 = vmatpush1.msra.mxu0 %v617
  %644 = vmatprep.subr.mxu0 0.0
  %645 = vmatpush1.msra.mxu0 %v616
  %646 = vmatprep.subr.mxu0 0.0
  %647 = vmatpush1.msra.mxu0 %v615
  %648 = vmatprep.subr.mxu0 0.0
  %649 = vmatpush1.msra.mxu0 %v614
  %650 = vmatprep.subr.mxu0 0.0
  %651 = vmatpush2.msra.mxu0 0.0
  %652 = vmatprep.subr.mxu0 0.0
  %653 = vmatpush2.msra.mxu0 0.0
  %654 = vmatprep.subr.mxu0 0.0
  %655 = vmatpush2.msra.mxu0 0.0
  %656 = vmatprep.subr.mxu0 0.0
  %657 = vmatpush2.msra.mxu0 0.0
  %658 = vmatprep.subr.mxu0 0.0
  %659 = vmatpush2.msra.mxu0 0.0
  %660 = vmatprep.subr.mxu0 0.0
  %661 = vmatpush2.msra.mxu0 0.0
  %662 = vmatprep.subr.mxu0 0.0
  %663 = vmatpush2.msra.mxu0 0.0
  %664 = vmatprep.subr.mxu0 0.0
  %665 = vmatpush2.msra.mxu0 0.0
  %666 = vmatprep.subr.mxu0 0.0
  %667 = vmatpush2.msra.mxu0 0.0
  %668 = vmatprep.subr.mxu0 0.0
  %669 = vmatpush2.msra.mxu0 0.0
  %670 = vmatprep.subr.mxu0 0.0
  %671 = vmatpush2.msra.mxu0 0.0
  %672 = vmatprep.subr.mxu0 0.0
  %673 = vmatpush2.msra.mxu0 0.0
  %674 = vmatprep.subr.mxu0 0.0
  %675 = vmatpush2.msra.mxu0 0.0
  %676 = vmatprep.subr.mxu0 0.0
  %677 = vmatpush2.msra.mxu0 0.0
  %678 = vmatprep.subr.mxu0 0.0
  %679 = vmatpush2.msra.mxu0 0.0
  %680 = vmatprep.subr.mxu0 0.0
  %681 = vmatpush2.msra.mxu0 0.0
  %682 = vmatprep.mubr.f32.mxu0 0.0
  %683 = vmatmul.mubr.f32.gmra.mxu0 %v232
  %v684 = vpop.f32.mrf.mxu0
  %v685 = vadd.f32 %v133, %v684
  %v686 = vpop.f32.mrf.mxu0
  %687 = vmatprep.mubr.f32.mxu0 0.0
  %688 = vmatmul.mubr.f32.gmra.mxu0 %v235
  %v689 = vpop.f32.mrf.mxu0
  %v690 = vadd.f32 %v138, %v689
  %v691 = vpop.f32.mrf.mxu0
  %692 = vmatprep.mubr.f32.mxu0 0.0
  %693 = vmatmul.mubr.f32.gmra.mxu0 %v238
  %v694 = vpop.f32.mrf.mxu0
  %v695 = vadd.f32 %v143, %v694
  %v696 = vpop.f32.mrf.mxu0
  %697 = vmatprep.mubr.f32.mxu0 0.0
  %698 = vmatmul.mubr.f32.gmra.mxu0 %v241
  %v699 = vpop.f32.mrf.mxu0
  %v700 = vadd.f32 %v148, %v699
  %v701 = vpop.f32.mrf.mxu0
  %702 = vmatprep.mubr.f32.mxu0 0.0
  %703 = vmatmul.mubr.f32.gmra.mxu0 %v244
  %v704 = vpop.f32.mrf.mxu0
  %v705 = vadd.f32 %v153, %v704
  %v706 = vpop.f32.mrf.mxu0
  %707 = vmatprep.mubr.f32.mxu0 0.0
  %708 = vmatmul.mubr.f32.gmra.mxu0 %v247
  %v709 = vpop.f32.mrf.mxu0
  %v710 = vadd.f32 %v158, %v709
  %v711 = vpop.f32.mrf.mxu0
  %712 = vmatprep.mubr.f32.mxu0 0.0
  %713 = vmatmul.mubr.f32.gmra.mxu0 %v250
  %v714 = vpop.f32.mrf.mxu0
  %v715 = vadd.f32 %v163, %v714
  %v716 = vpop.f32.mrf.mxu0
  %717 = vmatprep.mubr.f32.mxu0 0.0
  %718 = vmatmul.mubr.f32.gmra.mxu0 %v253
  %v719 = vpop.f32.mrf.mxu0
  %v720 = vadd.f32 %v168, %v719
  %v721 = vpop.f32.mrf.mxu0
  %722 = vmatprep.mubr.f32.mxu0 0.0
  %723 = vmatmul.mubr.f32.gmra.mxu0 %v256
  %v724 = vpop.f32.mrf.mxu0
  %v725 = vadd.f32 %v173, %v724
  %v726 = vpop.f32.mrf.mxu0
  %727 = vmatprep.mubr.f32.mxu0 0.0
  %728 = vmatmul.mubr.f32.gmra.mxu0 %v259
  %v729 = vpop.f32.mrf.mxu0
  %v730 = vadd.f32 %v178, %v729
  %v731 = vpop.f32.mrf.mxu0
  %732 = vmatprep.mubr.f32.mxu0 0.0
  %733 = vmatmul.mubr.f32.gmra.mxu0 %v262
  %v734 = vpop.f32.mrf.mxu0
  %v735 = vadd.f32 %v183, %v734
  %v736 = vpop.f32.mrf.mxu0
  %737 = vmatprep.mubr.f32.mxu0 0.0
  %738 = vmatmul.mubr.f32.gmra.mxu0 %v265
  %v739 = vpop.f32.mrf.mxu0
  %v740 = vadd.f32 %v188, %v739
  %v741 = vpop.f32.mrf.mxu0
  %742 = vmatprep.mubr.f32.mxu0 0.0
  %743 = vmatmul.mubr.f32.gmra.mxu0 %v268
  %v744 = vpop.f32.mrf.mxu0
  %v745 = vadd.f32 %v193, %v744
  %v746 = vpop.f32.mrf.mxu0
  %747 = vmatprep.mubr.f32.mxu0 0.0
  %748 = vmatmul.mubr.f32.gmra.mxu0 %v271
  %v749 = vpop.f32.mrf.mxu0
  %v750 = vadd.f32 %v198, %v749
  %v751 = vpop.f32.mrf.mxu0
  %752 = vmatprep.mubr.f32.mxu0 0.0
  %753 = vmatmul.mubr.f32.gmra.mxu0 %v274
  %v754 = vpop.f32.mrf.mxu0
  %v755 = vadd.f32 %v203, %v754
  %v756 = vpop.f32.mrf.mxu0
  %757 = vmatprep.mubr.f32.mxu0 0.0
  %758 = vmatmul.mubr.f32.gmra.mxu0 %v277
  %v759 = vpop.f32.mrf.mxu0
  %v760 = vadd.f32 %v208, %v759
  %v761 = vpop.f32.mrf.mxu0
  %762 = vmatprep.mubr.f32.mxu0 0.0
  %763 = vmatmul.mubr.f32.gmra.mxu0 %v280
  %v764 = vpop.f32.mrf.mxu0
  %v765 = vadd.f32 %v213, %v764
  %v766 = vpop.f32.mrf.mxu0
  %767 = vmatprep.mubr.f32.mxu0 0.0
  %768 = vmatmul.mubr.f32.gmra.mxu0 %v283
  %v769 = vpop.f32.mrf.mxu0
  %v770 = vadd.f32 %v218, %v769
  %v771 = vpop.f32.mrf.mxu0
  %772 = vmatprep.mubr.f32.mxu0 0.0
  %773 = vmatmul.mubr.f32.gmra.mxu0 %v286
  %v774 = vpop.f32.mrf.mxu0
  %v775 = vadd.f32 %v223, %v774
  %v776 = vpop.f32.mrf.mxu0
  %777 = vmatprep.mubr.f32.mxu0 0.0
  %778 = vmatmul.mubr.f32.gmra.mxu0 %v289
  %v779 = vpop.f32.mrf.mxu0
  %v780 = vadd.f32 %v228, %v779
  %v781 = vpop.f32.mrf.mxu0
  %782 = vdwg.mxu0
  %v783 = vmax.f32 %v685, 0.0
  %v784 = vmax.f32 %v690, 0.0
  %v785 = vmax.f32 %v695, 0.0
  %v786 = vmax.f32 %v700, 0.0
  %v787 = vmax.f32 %v705, 0.0
  %v788 = vmax.f32 %v710, 0.0
  %v789 = vmax.f32 %v715, 0.0
  %v790 = vmax.f32 %v720, 0.0
  %v791 = vmax.f32 %v725, 0.0
  %v792 = vmax.f32 %v730, 0.0
  %v793 = vmax.f32 %v735, 0.0
  %v794 = vmax.f32 %v740, 0.0
  %v795 = vmax.f32 %v745, 0.0
  %v796 = vmax.f32 %v750, 0.0
  %v797 = vmax.f32 %v755, 0.0
  %v798 = vmax.f32 %v760, 0.0
  %v799 = vmax.f32 %v765, 0.0
  %v800 = vmax.f32 %v770, 0.0
  %v801 = vmax.f32 %v775, 0.0
  %v802 = vmax.f32 %v780, 0.0
  %803 = vmatprep.subr.mxu0 0.0
  %804 = vmatpush1.msra.mxu0 %v798
  %805 = vmatprep.subr.mxu0 0.0
  %806 = vmatpush1.msra.mxu0 %v797
  %807 = vmatprep.subr.mxu0 0.0
  %808 = vmatpush1.msra.mxu0 %v796
  %809 = vmatprep.subr.mxu0 0.0
  %810 = vmatpush1.msra.mxu0 %v795
  %811 = vmatprep.subr.mxu0 0.0
  %812 = vmatpush1.msra.mxu0 %v794
  %813 = vmatprep.subr.mxu0 0.0
  %814 = vmatpush1.msra.mxu0 %v793
  %815 = vmatprep.subr.mxu0 0.0
  %816 = vmatpush1.msra.mxu0 %v792
  %817 = vmatprep.subr.mxu0 0.0
  %818 = vmatpush1.msra.mxu0 %v791
  %819 = vmatprep.subr.mxu0 0.0
  %820 = vmatpush1.msra.mxu0 %v790
  %821 = vmatprep.subr.mxu0 0.0
  %822 = vmatpush1.msra.mxu0 %v789
  %823 = vmatprep.subr.mxu0 0.0
  %824 = vmatpush1.msra.mxu0 %v788
  %825 = vmatprep.subr.mxu0 0.0
  %826 = vmatpush1.msra.mxu0 %v787
  %827 = vmatprep.subr.mxu0 0.0
  %828 = vmatpush1.msra.mxu0 %v786
  %829 = vmatprep.subr.mxu0 0.0
  %830 = vmatpush1.msra.mxu0 %v785
  %831 = vmatprep.subr.mxu0 0.0
  %832 = vmatpush1.msra.mxu0 %v784
  %833 = vmatprep.subr.mxu0 0.0
  %834 = vmatpush1.msra.mxu0 %v783
  %835 = vmatprep.subr.mxu0 0.0
  %836 = vmatpush2.msra.mxu0 0.0
  %837 = vmatprep.subr.mxu0 0.0
  %838 = vmatpush2.msra.mxu0 0.0
  %839 = vmatprep.subr.mxu0 0.0
  %840 = vmatpush2.msra.mxu0 0.0
  %841 = vmatprep.subr.mxu0 0.0
  %842 = vmatpush2.msra.mxu0 0.0
  %843 = vmatprep.subr.mxu0 0.0
  %844 = vmatpush2.msra.mxu0 0.0
  %845 = vmatprep.subr.mxu0 0.0
  %846 = vmatpush2.msra.mxu0 0.0
  %847 = vmatprep.subr.mxu0 0.0
  %848 = vmatpush2.msra.mxu0 0.0
  %849 = vmatprep.subr.mxu0 0.0
  %850 = vmatpush2.msra.mxu0 0.0
  %851 = vmatprep.subr.mxu0 0.0
  %852 = vmatpush2.msra.mxu0 0.0
  %853 = vmatprep.subr.mxu0 0.0
  %854 = vmatpush2.msra.mxu0 0.0
  %855 = vmatprep.subr.mxu0 0.0
  %856 = vmatpush2.msra.mxu0 0.0
  %857 = vmatprep.subr.mxu0 0.0
  %858 = vmatpush2.msra.mxu0 0.0
  %859 = vmatprep.subr.mxu0 0.0
  %860 = vmatpush2.msra.mxu0 %v802
  %861 = vmatprep.subr.mxu0 0.0
  %862 = vmatpush2.msra.mxu0 %v801
  %863 = vmatprep.subr.mxu0 0.0
  %864 = vmatpush2.msra.mxu0 %v800
  %865 = vmatprep.subr.mxu0 0.0
  %866 = vmatpush2.msra.mxu0 %v799
  %867 = vmatprep.mubr.f32.mxu0 %v482
  %868 = vmatmul.mubr.f32.gmra.mxu0 %v64
  %v869 = vpop.f32.mrf.mxu0
  %v870 = vadd.f32 %v479, %v869
  %v871 = vpop.f32.mrf.mxu0
  %872 = vdwg.mxu0
  %v873 = vmul.f32 %v604, %v605
  %v874 = vsub.f32 %v870, %v125
  %v875 = vmul.f32 %v874, %v559
  %v876 = vmul.f32 %v875, %v873
  %v877 = vadd.f32 %v876, %v581
  %878 = vst.msk [vmem:[%s5 + $0x8] sm:$0xff] %vm70, %v877
  // Predicated region
  $region22: #{pits_forward.1} parent=0 // pred_check
    _
  $region23: #{pits_forward.1} parent=0 // pred_check_branch
    %880 = sbr.rel (0) target = $region25
  $region24: #{pits_forward.1} parent=0 // pred_region
    _
  $region25: #{pits_forward.1} parent=0 // pred_fallthru
    _
  // Predicated region
  $region26: #{pits_forward.1} parent=0 // pred_check
    _
  $region27: #{pits_forward.1} parent=0 // pred_check_branch
    %882 = sbr.rel (0) target = $region29
  $region28: #{pits_forward.1} parent=0 // pred_region
    _
  $region29: #{pits_forward.1} parent=0 // pred_fallthru
    _

</llo_original>
